<compile_context>
chip_gen: v6e
topology: v6e:2x2x1
jax: 0.10.0
libtpu: 0.0.40
codegen_flags: <defaults>
</compile_context>

<pallas_src>
import jax
import jax.numpy as jnp
from jax.experimental import pallas as pl
from jax.experimental.pallas import tpu as pltpu  # noqa: F401  (TPU backend)


def _state_caps_kernel(x_ref, w_ref, b_ref, o_ref):
    # x_ref: (B, C*D)   w_ref: (C*D, C*O)   b_ref: (1, C*O)   o_ref: (B, C*O)
    y = jnp.dot(x_ref[...], w_ref[...], preferred_element_type=jnp.float32)
    y = jax.nn.sigmoid(y + b_ref[...])       # bias bcast (VPU) + sigmoid (EUP)
    o_ref[...] = y.astype(o_ref.dtype)       # one lane-dense store


def pack_params(W, b):
    """Pack per-capsule Linear params into block-diagonal form (done once).

    W: (C, O, D) -> W_bd: (C*D, C*O) with W_bd[c*D+d, c*O+o] = W[c, o, d]
    b: (C, O)    -> b_flat: (1, C*O)
    """
    C, O, D = W.shape
    eye = jnp.eye(C, dtype=W.dtype)
    W_bd = jnp.einsum("cod,ce->cdeo", W, eye).reshape(C * D, C * O)
    return W_bd, b.reshape(1, C * O)


def state_caps_forward(x, W_bd, b_flat):
    """x: (C, B, D)  W_bd: (C*D, C*O)  b_flat: (1, C*O)
    Returns (B, C, O) = sigmoid(stack_i(Linear_i(x[i])), dim=1)."""
    C, B, D = x.shape
    CO = W_bd.shape[1]
    O = CO // C

    # (C, B, D) -> (B, C*D): wrapper-side layout plumbing handled by XLA.
    x2d = jnp.transpose(x, (1, 0, 2)).reshape(B, C * D)

    out2d = pl.pallas_call(
        _state_caps_kernel,
        out_shape=jax.ShapeDtypeStruct((B, CO), x.dtype),
        in_specs=[
            pl.BlockSpec((B, C * D), lambda: (0, 0)),
            pl.BlockSpec((C * D, CO), lambda: (0, 0)),
            pl.BlockSpec((1, CO), lambda: (0, 0)),
        ],
        out_specs=pl.BlockSpec((B, CO), lambda: (0, 0)),
    )(x2d, W_bd, b_flat)

    # Free row-major metadata reshape back to (B, C, O).
    return out2d.reshape(B, C, O)


def _reference(x, W, b):
    # Pure-JAX reference of the PyTorch forward.
    u = jnp.einsum("cbd,cod->cbo", x, W) + b[:, None, :]
    return jax.nn.sigmoid(jnp.transpose(u, (1, 0, 2)))


if __name__ == "__main__":
    # Module defaults: dim_NMF_Program=50, out_channels=8, pc_num_caps=21
    dim_nmf = 50
    out_channels = 8
    pc_num_caps = 21
    batch = 4

    key = jax.random.PRNGKey(0)
    kx, kw, kb = jax.random.split(key, 3)

    # Deterministic parameter init (nn.Linear-style uniform bound 1/sqrt(fan_in)).
    bound = 1.0 / (dim_nmf ** 0.5)
    W = jax.random.uniform(kw, (pc_num_caps, out_channels, dim_nmf),
                           minval=-bound, maxval=bound, dtype=jnp.float32)
    b = jax.random.uniform(kb, (pc_num_caps, out_channels),
                           minval=-bound, maxval=bound, dtype=jnp.float32)

    x = jax.random.normal(kx, (pc_num_caps, batch, dim_nmf), dtype=jnp.float32)

    # Pack weights once (parameters), outside the kernel / per-call path.
    W_bd, b_flat = pack_params(W, b)

    out = jax.block_until_ready(state_caps_forward(x, W_bd, b_flat))
    ref = jax.block_until_ready(_reference(x, W, b))

    assert out.shape == (batch, pc_num_caps, out_channels), out.shape
    assert jnp.allclose(out, ref, atol=1e-5, rtol=1e-5), "mismatch vs reference"

    print("KERNEL_OK")
</pallas_src>

<mosaic_0001>
module attributes {stable_mosaic.version = 11 : i64} {
  func.func @_state_caps_kernel(%arg0: memref<4x1050xf32, #tpu.memory_space<vmem>>, %arg1: memref<1050x168xf32, #tpu.memory_space<vmem>>, %arg2: memref<1x168xf32, #tpu.memory_space<vmem>>, %arg3: memref<4x168xf32, #tpu.memory_space<vmem>>) attributes {dimension_semantics = [], scalar_prefetch = 0 : i64, scratch_operands = 0 : i64, tpu.core_type = #tpu.core_type<tc>} {
    %c0 = arith.constant 0 : index
    %c0_0 = arith.constant 0 : index
    %0 = vector.load %arg0[%c0, %c0_0] : memref<4x1050xf32, #tpu.memory_space<vmem>>, vector<4x1050xf32>
    %c0_1 = arith.constant 0 : index
    %c0_2 = arith.constant 0 : index
    %1 = vector.load %arg1[%c0_1, %c0_2] : memref<1050x168xf32, #tpu.memory_space<vmem>>, vector<1050x168xf32>
    %cst = arith.constant dense<0.000000e+00> : vector<4x168xf32>
    %2 = tpu.matmul %0, %1, %cst {dimension_numbers = #tpu.dot_dimension_numbers<[1], [0], [0], [1], [0, 0, 1, 1], [], []>} : vector<4x1050xf32>, vector<1050x168xf32>, vector<4x168xf32> -> vector<4x168xf32>
    %c0_3 = arith.constant 0 : index
    %c0_4 = arith.constant 0 : index
    %3 = vector.load %arg2[%c0_3, %c0_4] : memref<1x168xf32, #tpu.memory_space<vmem>>, vector<1x168xf32>
    %4 = vector.broadcast %3 : vector<1x168xf32> to vector<4x168xf32>
    %5 = arith.addf %2, %4 : vector<4x168xf32>
    %6 = arith.negf %5 : vector<4x168xf32>
    %7 = math.exp %6 : vector<4x168xf32>
    %cst_5 = arith.constant 1.000000e+00 : f32
    %8 = vector.broadcast %cst_5 : f32 to vector<4x168xf32>
    %9 = arith.addf %8, %7 : vector<4x168xf32>
    %10 = arith.divf %8, %9 : vector<4x168xf32>
    %c0_6 = arith.constant 0 : index
    %c0_7 = arith.constant 0 : index
    %11 = vector.load %arg3[%c0_6, %c0_7] : memref<4x168xf32, #tpu.memory_space<vmem>>, vector<4x168xf32>
    tpu.vector_store %arg3[%c0_6, %c0_7], %10 {strides = array<i32>} : memref<4x168xf32, #tpu.memory_space<vmem>>, vector<4x168xf32>,
    return
  }
}

</mosaic_0001>

<llo_original>
// kernel: tpu_custom_call.1
$region0: #{tpu_custom_call.1}
  #allocation0 [shape = 'u32[]', space=smem, size = 0x4, offset = 0x4, fixed_abs, tag = 'smem constant byte address 0x4 - core index']
  #allocation1 [shape = 'u32[144,128]{1,0:T(1,128)}', space=vmem, size = 0x12000, scoped, tag = 'internal scratch']
  %s0 = inlined_call_operand.vmem [shape: f32[4,1050], index: 0, kind: input, shape index: {}]
  %s1 = inlined_call_operand.vmem [shape: f32[1050,168], index: 1, kind: input, shape index: {}]
  %s2 = inlined_call_operand.vmem [shape: f32[1,168], index: 2, kind: input, shape index: {}]
  %s3 = inlined_call_operand.hbm [shape: f32[4,168], index: 3, kind: output, shape index: {}]
  %s4 = sld [smem:[#allocation0]]
  $region22: #{tpu_custom_call.1} parent=0
    _
  %s6 = ssub.s32 1, %s4
  %s7 = scalar_select 0, %s6, %s4
  $region1: #{tpu_custom_call.1} parent=0
    #allocation2 [shape = 'u8[4096]{0}', space=vmem, size = 0x1000, scoped, tag = 'output window, operand 0, single buffered']
    #allocation3 [shape = 's32[1]{0}', space=sflag, size = 0x4, scoped, tag = 'scoped memory for tpu_custom_call.1']
    %8 = vsyncpa [#allocation3], 0
    // Predicated region
    $region2: #{tpu_custom_call.1} parent=1 // pred_check
      _
    $region3: #{tpu_custom_call.1} parent=1 // pred_check_branch
      %10 = sbr.rel (0) target = $region5
    $region4: #{tpu_custom_call.1} parent=1 // pred_region
      _
    $region5: #{tpu_custom_call.1} parent=1 // pred_fallthru
      _
    // Predicated region
    $region6: #{tpu_custom_call.1} parent=1 // pred_check
      _
    $region7: #{tpu_custom_call.1} parent=1 // pred_check_branch
      %12 = sbr.rel (0) target = $region9
    $region8: #{tpu_custom_call.1} parent=1 // pred_region
      _
    $region9: #{tpu_custom_call.1} parent=1 // pred_fallthru
      _
    // Predicated region
    $region10: #{tpu_custom_call.1} parent=1 // pred_check
      _
    $region11: #{tpu_custom_call.1} parent=1 // pred_check_branch
      %14 = sbr.rel (0) target = $region13
    $region12: #{tpu_custom_call.1} parent=1 // pred_region
      _
    $region13: #{tpu_custom_call.1} parent=1 // pred_fallthru
      _
    %v15 = vld [vmem:[%s0] sm:$0xff]
    %v16 = vld [vmem:[%s0 + $0x8] sm:$0xff]
    %v17 = vld [vmem:[%s0 + $0x10] sm:$0xff]
    %v18 = vld [vmem:[%s0 + $0x18] sm:$0xff]
    %v19 = vld [vmem:[%s0 + $0x20] sm:$0xf]
    %v20 = vld [vmem:[%s1] sm:$0xff]
    %v21 = vld [vmem:[%s1 + $0x8] sm:$0xff]
    %v22 = vld [vmem:[%s1 + $0x10] sm:$0xff]
    %v23 = vld [vmem:[%s1 + $0x18] sm:$0xff]
    %v24 = vld [vmem:[%s1 + $0x20] sm:$0xff]
    %v25 = vld [vmem:[%s1 + $0x28] sm:$0xff]
    %v26 = vld [vmem:[%s1 + $0x30] sm:$0xff]
    %v27 = vld [vmem:[%s1 + $0x38] sm:$0xff]
    %v28 = vld [vmem:[%s1 + $0x40] sm:$0xff]
    %v29 = vld [vmem:[%s1 + $0x48] sm:$0xff]
    %v30 = vld [vmem:[%s1 + $0x50] sm:$0xff]
    %v31 = vld [vmem:[%s1 + $0x58] sm:$0xff]
    %v32 = vld [vmem:[%s1 + $0x60] sm:$0xff]
    %v33 = vld [vmem:[%s1 + $0x68] sm:$0xff]
    %v34 = vld [vmem:[%s1 + $0x70] sm:$0xff]
    %v35 = vld [vmem:[%s1 + $0x78] sm:$0xff]
    %v36 = vld [vmem:[%s1 + $0x80] sm:$0xff]
    %v37 = vld [vmem:[%s1 + $0x88] sm:$0xff]
    %v38 = vld [vmem:[%s1 + $0x90] sm:$0xff]
    %v39 = vld [vmem:[%s1 + $0x98] sm:$0xff]
    %v40 = vld [vmem:[%s1 + $0xa0] sm:$0xff]
    %v41 = vld [vmem:[%s1 + $0xa8] sm:$0xff]
    %v42 = vld [vmem:[%s1 + $0xb0] sm:$0xff]
    %v43 = vld [vmem:[%s1 + $0xb8] sm:$0xff]
    %v44 = vld [vmem:[%s1 + $0xc0] sm:$0xff]
    %v45 = vld [vmem:[%s1 + $0xc8] sm:$0xff]
    %v46 = vld [vmem:[%s1 + $0xd0] sm:$0xff]
    %v47 = vld [vmem:[%s1 + $0xd8] sm:$0xff]
    %v48 = vld [vmem:[%s1 + $0xe0] sm:$0xff]
    %v49 = vld [vmem:[%s1 + $0xe8] sm:$0xff]
    %v50 = vld [vmem:[%s1 + $0xf0] sm:$0xff]
    %v51 = vld [vmem:[%s1 + $0xf8] sm:$0xff]
    %v52 = vld [vmem:[%s1 + $0x100] sm:$0xff]
    %v53 = vld [vmem:[%s1 + $0x108] sm:$0xff]
    %v54 = vld [vmem:[%s1 + $0x110] sm:$0xff]
    %v55 = vld [vmem:[%s1 + $0x118] sm:$0xff]
    %v56 = vld [vmem:[%s1 + $0x120] sm:$0xff]
    %v57 = vld [vmem:[%s1 + $0x128] sm:$0xff]
    %v58 = vld [vmem:[%s1 + $0x130] sm:$0xff]
    %v59 = vld [vmem:[%s1 + $0x138] sm:$0xff]
    %v60 = vld [vmem:[%s1 + $0x140] sm:$0xff]
    %v61 = vld [vmem:[%s1 + $0x148] sm:$0xff]
    %v62 = vld [vmem:[%s1 + $0x150] sm:$0xff]
    %v63 = vld [vmem:[%s1 + $0x158] sm:$0xff]
    %v64 = vld [vmem:[%s1 + $0x160] sm:$0xff]
    %v65 = vld [vmem:[%s1 + $0x168] sm:$0xff]
    %v66 = vld [vmem:[%s1 + $0x170] sm:$0xff]
    %v67 = vld [vmem:[%s1 + $0x178] sm:$0xff]
    %v68 = vld [vmem:[%s1 + $0x180] sm:$0xff]
    %v69 = vld [vmem:[%s1 + $0x188] sm:$0xff]
    %v70 = vld [vmem:[%s1 + $0x190] sm:$0xff]
    %v71 = vld [vmem:[%s1 + $0x198] sm:$0xff]
    %v72 = vld [vmem:[%s1 + $0x1a0] sm:$0xff]
    %v73 = vld [vmem:[%s1 + $0x1a8] sm:$0xff]
    %v74 = vld [vmem:[%s1 + $0x1b0] sm:$0xff]
    %v75 = vld [vmem:[%s1 + $0x1b8] sm:$0xff]
    %v76 = vld [vmem:[%s1 + $0x1c0] sm:$0xff]
    %v77 = vld [vmem:[%s1 + $0x1c8] sm:$0xff]
    %v78 = vld [vmem:[%s1 + $0x1d0] sm:$0xff]
    %v79 = vld [vmem:[%s1 + $0x1d8] sm:$0xff]
    %v80 = vld [vmem:[%s1 + $0x1e0] sm:$0xff]
    %v81 = vld [vmem:[%s1 + $0x1e8] sm:$0xff]
    %v82 = vld [vmem:[%s1 + $0x1f0] sm:$0xff]
    %v83 = vld [vmem:[%s1 + $0x1f8] sm:$0xff]
    %v84 = vld [vmem:[%s1 + $0x200] sm:$0xff]
    %v85 = vld [vmem:[%s1 + $0x208] sm:$0xff]
    %v86 = vld [vmem:[%s1 + $0x210] sm:$0xff]
    %v87 = vld [vmem:[%s1 + $0x218] sm:$0xff]
    %v88 = vld [vmem:[%s1 + $0x220] sm:$0xff]
    %v89 = vld [vmem:[%s1 + $0x228] sm:$0xff]
    %v90 = vld [vmem:[%s1 + $0x230] sm:$0xff]
    %v91 = vld [vmem:[%s1 + $0x238] sm:$0xff]
    %v92 = vld [vmem:[%s1 + $0x240] sm:$0xff]
    %v93 = vld [vmem:[%s1 + $0x248] sm:$0xff]
    %v94 = vld [vmem:[%s1 + $0x250] sm:$0xff]
    %v95 = vld [vmem:[%s1 + $0x258] sm:$0xff]
    %v96 = vld [vmem:[%s1 + $0x260] sm:$0xff]
    %v97 = vld [vmem:[%s1 + $0x268] sm:$0xff]
    %v98 = vld [vmem:[%s1 + $0x270] sm:$0xff]
    %v99 = vld [vmem:[%s1 + $0x278] sm:$0xff]
    %v100 = vld [vmem:[%s1 + $0x280] sm:$0xff]
    %v101 = vld [vmem:[%s1 + $0x288] sm:$0xff]
    %v102 = vld [vmem:[%s1 + $0x290] sm:$0xff]
    %v103 = vld [vmem:[%s1 + $0x298] sm:$0xff]
    %v104 = vld [vmem:[%s1 + $0x2a0] sm:$0xff]
    %v105 = vld [vmem:[%s1 + $0x2a8] sm:$0xff]
    %v106 = vld [vmem:[%s1 + $0x2b0] sm:$0xff]
    %v107 = vld [vmem:[%s1 + $0x2b8] sm:$0xff]
    %v108 = vld [vmem:[%s1 + $0x2c0] sm:$0xff]
    %v109 = vld [vmem:[%s1 + $0x2c8] sm:$0xff]
    %v110 = vld [vmem:[%s1 + $0x2d0] sm:$0xff]
    %v111 = vld [vmem:[%s1 + $0x2d8] sm:$0xff]
    %v112 = vld [vmem:[%s1 + $0x2e0] sm:$0xff]
    %v113 = vld [vmem:[%s1 + $0x2e8] sm:$0xff]
    %v114 = vld [vmem:[%s1 + $0x2f0] sm:$0xff]
    %v115 = vld [vmem:[%s1 + $0x2f8] sm:$0xff]
    %v116 = vld [vmem:[%s1 + $0x300] sm:$0xff]
    %v117 = vld [vmem:[%s1 + $0x308] sm:$0xff]
    %v118 = vld [vmem:[%s1 + $0x310] sm:$0xff]
    %v119 = vld [vmem:[%s1 + $0x318] sm:$0xff]
    %v120 = vld [vmem:[%s1 + $0x320] sm:$0xff]
    %v121 = vld [vmem:[%s1 + $0x328] sm:$0xff]
    %v122 = vld [vmem:[%s1 + $0x330] sm:$0xff]
    %v123 = vld [vmem:[%s1 + $0x338] sm:$0xff]
    %v124 = vld [vmem:[%s1 + $0x340] sm:$0xff]
    %v125 = vld [vmem:[%s1 + $0x348] sm:$0xff]
    %v126 = vld [vmem:[%s1 + $0x350] sm:$0xff]
    %v127 = vld [vmem:[%s1 + $0x358] sm:$0xff]
    %v128 = vld [vmem:[%s1 + $0x360] sm:$0xff]
    %v129 = vld [vmem:[%s1 + $0x368] sm:$0xff]
    %v130 = vld [vmem:[%s1 + $0x370] sm:$0xff]
    %v131 = vld [vmem:[%s1 + $0x378] sm:$0xff]
    %v132 = vld [vmem:[%s1 + $0x380] sm:$0xff]
    %v133 = vld [vmem:[%s1 + $0x388] sm:$0xff]
    %v134 = vld [vmem:[%s1 + $0x390] sm:$0xff]
    %v135 = vld [vmem:[%s1 + $0x398] sm:$0xff]
    %v136 = vld [vmem:[%s1 + $0x3a0] sm:$0xff]
    %v137 = vld [vmem:[%s1 + $0x3a8] sm:$0xff]
    %v138 = vld [vmem:[%s1 + $0x3b0] sm:$0xff]
    %v139 = vld [vmem:[%s1 + $0x3b8] sm:$0xff]
    %v140 = vld [vmem:[%s1 + $0x3c0] sm:$0xff]
    %v141 = vld [vmem:[%s1 + $0x3c8] sm:$0xff]
    %v142 = vld [vmem:[%s1 + $0x3d0] sm:$0xff]
    %v143 = vld [vmem:[%s1 + $0x3d8] sm:$0xff]
    %v144 = vld [vmem:[%s1 + $0x3e0] sm:$0xff]
    %v145 = vld [vmem:[%s1 + $0x3e8] sm:$0xff]
    %v146 = vld [vmem:[%s1 + $0x3f0] sm:$0xff]
    %v147 = vld [vmem:[%s1 + $0x3f8] sm:$0xff]
    %v148 = vld [vmem:[%s1 + $0x400] sm:$0xff]
    %v149 = vld [vmem:[%s1 + $0x408] sm:$0xff]
    %v150 = vld [vmem:[%s1 + $0x410] sm:$0xff]
    %v151 = vld [vmem:[%s1 + $0x418] sm:$0xff]
    %v152 = vld [vmem:[%s1 + $0x420] sm:$0xff]
    %v153 = vld [vmem:[%s1 + $0x428] sm:$0xff]
    %v154 = vld [vmem:[%s1 + $0x430] sm:$0xff]
    %v155 = vld [vmem:[%s1 + $0x438] sm:$0xff]
    %v156 = vld [vmem:[%s1 + $0x440] sm:$0xff]
    %v157 = vld [vmem:[%s1 + $0x448] sm:$0xff]
    %v158 = vld [vmem:[%s1 + $0x450] sm:$0xff]
    %v159 = vld [vmem:[%s1 + $0x458] sm:$0xff]
    %v160 = vld [vmem:[%s1 + $0x460] sm:$0xff]
    %v161 = vld [vmem:[%s1 + $0x468] sm:$0xff]
    %v162 = vld [vmem:[%s1 + $0x470] sm:$0xff]
    %v163 = vld [vmem:[%s1 + $0x478] sm:$0xff]
    %v164 = vld [vmem:[%s1 + $0x480] sm:$0xff]
    %v165 = vld [vmem:[%s1 + $0x488] sm:$0xff]
    %v166 = vld [vmem:[%s1 + $0x490] sm:$0xff]
    %v167 = vld [vmem:[%s1 + $0x498] sm:$0xff]
    %v168 = vld [vmem:[%s1 + $0x4a0] sm:$0xff]
    %v169 = vld [vmem:[%s1 + $0x4a8] sm:$0xff]
    %v170 = vld [vmem:[%s1 + $0x4b0] sm:$0xff]
    %v171 = vld [vmem:[%s1 + $0x4b8] sm:$0xff]
    %v172 = vld [vmem:[%s1 + $0x4c0] sm:$0xff]
    %v173 = vld [vmem:[%s1 + $0x4c8] sm:$0xff]
    %v174 = vld [vmem:[%s1 + $0x4d0] sm:$0xff]
    %v175 = vld [vmem:[%s1 + $0x4d8] sm:$0xff]
    %v176 = vld [vmem:[%s1 + $0x4e0] sm:$0xff]
    %v177 = vld [vmem:[%s1 + $0x4e8] sm:$0xff]
    %v178 = vld [vmem:[%s1 + $0x4f0] sm:$0xff]
    %v179 = vld [vmem:[%s1 + $0x4f8] sm:$0xff]
    %v180 = vld [vmem:[%s1 + $0x500] sm:$0xff]
    %v181 = vld [vmem:[%s1 + $0x508] sm:$0xff]
    %v182 = vld [vmem:[%s1 + $0x510] sm:$0xff]
    %v183 = vld [vmem:[%s1 + $0x518] sm:$0xff]
    %v184 = vld [vmem:[%s1 + $0x520] sm:$0xff]
    %v185 = vld [vmem:[%s1 + $0x528] sm:$0xff]
    %v186 = vld [vmem:[%s1 + $0x530] sm:$0xff]
    %v187 = vld [vmem:[%s1 + $0x538] sm:$0xff]
    %v188 = vld [vmem:[%s1 + $0x540] sm:$0xff]
    %v189 = vld [vmem:[%s1 + $0x548] sm:$0xff]
    %v190 = vld [vmem:[%s1 + $0x550] sm:$0xff]
    %v191 = vld [vmem:[%s1 + $0x558] sm:$0xff]
    %v192 = vld [vmem:[%s1 + $0x560] sm:$0xff]
    %v193 = vld [vmem:[%s1 + $0x568] sm:$0xff]
    %v194 = vld [vmem:[%s1 + $0x570] sm:$0xff]
    %v195 = vld [vmem:[%s1 + $0x578] sm:$0xff]
    %v196 = vld [vmem:[%s1 + $0x580] sm:$0xff]
    %v197 = vld [vmem:[%s1 + $0x588] sm:$0xff]
    %v198 = vld [vmem:[%s1 + $0x590] sm:$0xff]
    %v199 = vld [vmem:[%s1 + $0x598] sm:$0xff]
    %v200 = vld [vmem:[%s1 + $0x5a0] sm:$0xff]
    %v201 = vld [vmem:[%s1 + $0x5a8] sm:$0xff]
    %v202 = vld [vmem:[%s1 + $0x5b0] sm:$0xff]
    %v203 = vld [vmem:[%s1 + $0x5b8] sm:$0xff]
    %v204 = vld [vmem:[%s1 + $0x5c0] sm:$0xff]
    %v205 = vld [vmem:[%s1 + $0x5c8] sm:$0xff]
    %v206 = vld [vmem:[%s1 + $0x5d0] sm:$0xff]
    %v207 = vld [vmem:[%s1 + $0x5d8] sm:$0xff]
    %v208 = vld [vmem:[%s1 + $0x5e0] sm:$0xff]
    %v209 = vld [vmem:[%s1 + $0x5e8] sm:$0xff]
    %v210 = vld [vmem:[%s1 + $0x5f0] sm:$0xff]
    %v211 = vld [vmem:[%s1 + $0x5f8] sm:$0xff]
    %v212 = vld [vmem:[%s1 + $0x600] sm:$0xff]
    %v213 = vld [vmem:[%s1 + $0x608] sm:$0xff]
    %v214 = vld [vmem:[%s1 + $0x610] sm:$0xff]
    %v215 = vld [vmem:[%s1 + $0x618] sm:$0xff]
    %v216 = vld [vmem:[%s1 + $0x620] sm:$0xff]
    %v217 = vld [vmem:[%s1 + $0x628] sm:$0xff]
    %v218 = vld [vmem:[%s1 + $0x630] sm:$0xff]
    %v219 = vld [vmem:[%s1 + $0x638] sm:$0xff]
    %v220 = vld [vmem:[%s1 + $0x640] sm:$0xff]
    %v221 = vld [vmem:[%s1 + $0x648] sm:$0xff]
    %v222 = vld [vmem:[%s1 + $0x650] sm:$0xff]
    %v223 = vld [vmem:[%s1 + $0x658] sm:$0xff]
    %v224 = vld [vmem:[%s1 + $0x660] sm:$0xff]
    %v225 = vld [vmem:[%s1 + $0x668] sm:$0xff]
    %v226 = vld [vmem:[%s1 + $0x670] sm:$0xff]
    %v227 = vld [vmem:[%s1 + $0x678] sm:$0xff]
    %v228 = vld [vmem:[%s1 + $0x680] sm:$0xff]
    %v229 = vld [vmem:[%s1 + $0x688] sm:$0xff]
    %v230 = vld [vmem:[%s1 + $0x690] sm:$0xff]
    %v231 = vld [vmem:[%s1 + $0x698] sm:$0xff]
    %v232 = vld [vmem:[%s1 + $0x6a0] sm:$0xff]
    %v233 = vld [vmem:[%s1 + $0x6a8] sm:$0xff]
    %v234 = vld [vmem:[%s1 + $0x6b0] sm:$0xff]
    %v235 = vld [vmem:[%s1 + $0x6b8] sm:$0xff]
    %v236 = vld [vmem:[%s1 + $0x6c0] sm:$0xff]
    %v237 = vld [vmem:[%s1 + $0x6c8] sm:$0xff]
    %v238 = vld [vmem:[%s1 + $0x6d0] sm:$0xff]
    %v239 = vld [vmem:[%s1 + $0x6d8] sm:$0xff]
    %v240 = vld [vmem:[%s1 + $0x6e0] sm:$0xff]
    %v241 = vld [vmem:[%s1 + $0x6e8] sm:$0xff]
    %v242 = vld [vmem:[%s1 + $0x6f0] sm:$0xff]
    %v243 = vld [vmem:[%s1 + $0x6f8] sm:$0xff]
    %v244 = vld [vmem:[%s1 + $0x700] sm:$0xff]
    %v245 = vld [vmem:[%s1 + $0x708] sm:$0xff]
    %v246 = vld [vmem:[%s1 + $0x710] sm:$0xff]
    %v247 = vld [vmem:[%s1 + $0x718] sm:$0xff]
    %v248 = vld [vmem:[%s1 + $0x720] sm:$0xff]
    %v249 = vld [vmem:[%s1 + $0x728] sm:$0xff]
    %v250 = vld [vmem:[%s1 + $0x730] sm:$0xff]
    %v251 = vld [vmem:[%s1 + $0x738] sm:$0xff]
    %v252 = vld [vmem:[%s1 + $0x740] sm:$0xff]
    %v253 = vld [vmem:[%s1 + $0x748] sm:$0xff]
    %v254 = vld [vmem:[%s1 + $0x750] sm:$0xff]
    %v255 = vld [vmem:[%s1 + $0x758] sm:$0xff]
    %v256 = vld [vmem:[%s1 + $0x760] sm:$0xff]
    %v257 = vld [vmem:[%s1 + $0x768] sm:$0xff]
    %v258 = vld [vmem:[%s1 + $0x770] sm:$0xff]
    %v259 = vld [vmem:[%s1 + $0x778] sm:$0xff]
    %v260 = vld [vmem:[%s1 + $0x780] sm:$0xff]
    %v261 = vld [vmem:[%s1 + $0x788] sm:$0xff]
    %v262 = vld [vmem:[%s1 + $0x790] sm:$0xff]
    %v263 = vld [vmem:[%s1 + $0x798] sm:$0xff]
    %v264 = vld [vmem:[%s1 + $0x7a0] sm:$0xff]
    %v265 = vld [vmem:[%s1 + $0x7a8] sm:$0xff]
    %v266 = vld [vmem:[%s1 + $0x7b0] sm:$0xff]
    %v267 = vld [vmem:[%s1 + $0x7b8] sm:$0xff]
    %v268 = vld [vmem:[%s1 + $0x7c0] sm:$0xff]
    %v269 = vld [vmem:[%s1 + $0x7c8] sm:$0xff]
    %v270 = vld [vmem:[%s1 + $0x7d0] sm:$0xff]
    %v271 = vld [vmem:[%s1 + $0x7d8] sm:$0xff]
    %v272 = vld [vmem:[%s1 + $0x7e0] sm:$0xff]
    %v273 = vld [vmem:[%s1 + $0x7e8] sm:$0xff]
    %v274 = vld [vmem:[%s1 + $0x7f0] sm:$0xff]
    %v275 = vld [vmem:[%s1 + $0x7f8] sm:$0xff]
    %v276 = vld [vmem:[%s1 + $0x800] sm:$0xff]
    %v277 = vld [vmem:[%s1 + $0x808] sm:$0xff]
    %v278 = vld [vmem:[%s1 + $0x810] sm:$0xff]
    %v279 = vld [vmem:[%s1 + $0x818] sm:$0xff]
    %v280 = vld [vmem:[%s1 + $0x820] sm:$0xff]
    %v281 = vld [vmem:[%s1 + $0x828] sm:$0xff]
    %v282 = vld [vmem:[%s1 + $0x830] sm:$0x3]
    %v283 = vld [vmem:[%s1 + $0x838] sm:$0x3]
    %v284 = vld [vmem:[%s2] sm:$0x3]
    %v286 = vlaneseq
    %v287 = vshrl.u32 %v286, 7
    %v288 = vsub.s32 0, %v287
    %v289 = vrot.slane %v284, %v288
    %v290 = vlaneseq
    %v291 = vshrl.u32 %v290, 7
    %v292 = vsub.s32 1, %v291
    %v293 = vrot.slane %v284, %v292
    %v301 = vcombine.high %v15, %v15
    %v302 = vcombine.high %v16, %v16
    %v303 = vcombine.high %v17, %v17
    %v304 = vcombine.high %v18, %v18
    %vm309 = vcmask 211968
    %v310 = vsel %vm309, %v19, 0
    %vm312 = vcmask 1041408
    %v314 = vsel %vm312, %v282, 0
    %v317 = vsel %vm312, %v283, 0
    %319 = vmatprep.subr.mxu0 %v51
    %320 = vmatpush1.msra.mxu0 %v50
    %321 = vmatprep.subr.mxu0 %v49
    %322 = vmatpush1.msra.mxu0 %v48
    %323 = vmatprep.subr.mxu0 %v47
    %324 = vmatpush1.msra.mxu0 %v46
    %325 = vmatprep.subr.mxu0 %v45
    %326 = vmatpush1.msra.mxu0 %v44
    %327 = vmatprep.subr.mxu0 %v43
    %328 = vmatpush1.msra.mxu0 %v42
    %329 = vmatprep.subr.mxu0 %v41
    %330 = vmatpush1.msra.mxu0 %v40
    %331 = vmatprep.subr.mxu0 %v39
    %332 = vmatpush1.msra.mxu0 %v38
    %333 = vmatprep.subr.mxu0 %v37
    %334 = vmatpush1.msra.mxu0 %v36
    %335 = vmatprep.subr.mxu0 %v35
    %336 = vmatpush1.msra.mxu0 %v34
    %337 = vmatprep.subr.mxu0 %v33
    %338 = vmatpush1.msra.mxu0 %v32
    %339 = vmatprep.subr.mxu0 %v31
    %340 = vmatpush1.msra.mxu0 %v30
    %341 = vmatprep.subr.mxu0 %v29
    %342 = vmatpush1.msra.mxu0 %v28
    %343 = vmatprep.subr.mxu0 %v27
    %344 = vmatpush1.msra.mxu0 %v26
    %345 = vmatprep.subr.mxu0 %v25
    %346 = vmatpush1.msra.mxu0 %v24
    %347 = vmatprep.subr.mxu0 %v23
    %348 = vmatpush1.msra.mxu0 %v22
    %349 = vmatprep.subr.mxu0 %v21
    %350 = vmatpush1.msra.mxu0 %v20
    %351 = vmatprep.subr.mxu0 %v83
    %352 = vmatpush2.msra.mxu0 %v82
    %353 = vmatprep.subr.mxu0 %v81
    %354 = vmatpush2.msra.mxu0 %v80
    %355 = vmatprep.subr.mxu0 %v79
    %356 = vmatpush2.msra.mxu0 %v78
    %357 = vmatprep.subr.mxu0 %v77
    %358 = vmatpush2.msra.mxu0 %v76
    %359 = vmatprep.subr.mxu0 %v75
    %360 = vmatpush2.msra.mxu0 %v74
    %361 = vmatprep.subr.mxu0 %v73
    %362 = vmatpush2.msra.mxu0 %v72
    %363 = vmatprep.subr.mxu0 %v71
    %364 = vmatpush2.msra.mxu0 %v70
    %365 = vmatprep.subr.mxu0 %v69
    %366 = vmatpush2.msra.mxu0 %v68
    %367 = vmatprep.subr.mxu0 %v67
    %368 = vmatpush2.msra.mxu0 %v66
    %369 = vmatprep.subr.mxu0 %v65
    %370 = vmatpush2.msra.mxu0 %v64
    %371 = vmatprep.subr.mxu0 %v63
    %372 = vmatpush2.msra.mxu0 %v62
    %373 = vmatprep.subr.mxu0 %v61
    %374 = vmatpush2.msra.mxu0 %v60
    %375 = vmatprep.subr.mxu0 %v59
    %376 = vmatpush2.msra.mxu0 %v58
    %377 = vmatprep.subr.mxu0 %v57
    %378 = vmatpush2.msra.mxu0 %v56
    %379 = vmatprep.subr.mxu0 %v55
    %380 = vmatpush2.msra.mxu0 %v54
    %381 = vmatprep.subr.mxu0 %v53
    %382 = vmatpush2.msra.mxu0 %v52
    %383 = vmatprep.mubr.f32.mxu0 %v301
    %384 = vmatmul.mubr.f32.gmra.mxu0 %v15
    %v385 = vpop.f32.mrf.mxu0
    %v386 = vadd.f32 %v289, %v385
    %v387 = vpop.f32.mrf.mxu0
    %v388 = vadd.f32 %v293, %v387
    %389 = vdwg.mxu0
    %390 = vmatprep.subr.mxu0 %v115
    %391 = vmatpush1.msra.mxu0 %v114
    %392 = vmatprep.subr.mxu0 %v113
    %393 = vmatpush1.msra.mxu0 %v112
    %394 = vmatprep.subr.mxu0 %v111
    %395 = vmatpush1.msra.mxu0 %v110
    %396 = vmatprep.subr.mxu0 %v109
    %397 = vmatpush1.msra.mxu0 %v108
    %398 = vmatprep.subr.mxu0 %v107
    %399 = vmatpush1.msra.mxu0 %v106
    %400 = vmatprep.subr.mxu0 %v105
    %401 = vmatpush1.msra.mxu0 %v104
    %402 = vmatprep.subr.mxu0 %v103
    %403 = vmatpush1.msra.mxu0 %v102
    %404 = vmatprep.subr.mxu0 %v101
    %405 = vmatpush1.msra.mxu0 %v100
    %406 = vmatprep.subr.mxu0 %v99
    %407 = vmatpush1.msra.mxu0 %v98
    %408 = vmatprep.subr.mxu0 %v97
    %409 = vmatpush1.msra.mxu0 %v96
    %410 = vmatprep.subr.mxu0 %v95
    %411 = vmatpush1.msra.mxu0 %v94
    %412 = vmatprep.subr.mxu0 %v93
    %413 = vmatpush1.msra.mxu0 %v92
    %414 = vmatprep.subr.mxu0 %v91
    %415 = vmatpush1.msra.mxu0 %v90
    %416 = vmatprep.subr.mxu0 %v89
    %417 = vmatpush1.msra.mxu0 %v88
    %418 = vmatprep.subr.mxu0 %v87
    %419 = vmatpush1.msra.mxu0 %v86
    %420 = vmatprep.subr.mxu0 %v85
    %421 = vmatpush1.msra.mxu0 %v84
    %422 = vmatprep.subr.mxu0 %v147
    %423 = vmatpush2.msra.mxu0 %v146
    %424 = vmatprep.subr.mxu0 %v145
    %425 = vmatpush2.msra.mxu0 %v144
    %426 = vmatprep.subr.mxu0 %v143
    %427 = vmatpush2.msra.mxu0 %v142
    %428 = vmatprep.subr.mxu0 %v141
    %429 = vmatpush2.msra.mxu0 %v140
    %430 = vmatprep.subr.mxu0 %v139
    %431 = vmatpush2.msra.mxu0 %v138
    %432 = vmatprep.subr.mxu0 %v137
    %433 = vmatpush2.msra.mxu0 %v136
    %434 = vmatprep.subr.mxu0 %v135
    %435 = vmatpush2.msra.mxu0 %v134
    %436 = vmatprep.subr.mxu0 %v133
    %437 = vmatpush2.msra.mxu0 %v132
    %438 = vmatprep.subr.mxu0 %v131
    %439 = vmatpush2.msra.mxu0 %v130
    %440 = vmatprep.subr.mxu0 %v129
    %441 = vmatpush2.msra.mxu0 %v128
    %442 = vmatprep.subr.mxu0 %v127
    %443 = vmatpush2.msra.mxu0 %v126
    %444 = vmatprep.subr.mxu0 %v125
    %445 = vmatpush2.msra.mxu0 %v124
    %446 = vmatprep.subr.mxu0 %v123
    %447 = vmatpush2.msra.mxu0 %v122
    %448 = vmatprep.subr.mxu0 %v121
    %449 = vmatpush2.msra.mxu0 %v120
    %450 = vmatprep.subr.mxu0 %v119
    %451 = vmatpush2.msra.mxu0 %v118
    %452 = vmatprep.subr.mxu0 %v117
    %453 = vmatpush2.msra.mxu0 %v116
    %454 = vmatprep.mubr.f32.mxu0 %v302
    %455 = vmatmul.mubr.f32.gmra.mxu0 %v16
    %v456 = vpop.f32.mrf.mxu0
    %v457 = vadd.f32 %v386, %v456
    %v458 = vpop.f32.mrf.mxu0
    %v459 = vadd.f32 %v388, %v458
    %460 = vdwg.mxu0
    %461 = vmatprep.subr.mxu0 %v179
    %462 = vmatpush1.msra.mxu0 %v178
    %463 = vmatprep.subr.mxu0 %v177
    %464 = vmatpush1.msra.mxu0 %v176
    %465 = vmatprep.subr.mxu0 %v175
    %466 = vmatpush1.msra.mxu0 %v174
    %467 = vmatprep.subr.mxu0 %v173
    %468 = vmatpush1.msra.mxu0 %v172
    %469 = vmatprep.subr.mxu0 %v171
    %470 = vmatpush1.msra.mxu0 %v170
    %471 = vmatprep.subr.mxu0 %v169
    %472 = vmatpush1.msra.mxu0 %v168
    %473 = vmatprep.subr.mxu0 %v167
    %474 = vmatpush1.msra.mxu0 %v166
    %475 = vmatprep.subr.mxu0 %v165
    %476 = vmatpush1.msra.mxu0 %v164
    %477 = vmatprep.subr.mxu0 %v163
    %478 = vmatpush1.msra.mxu0 %v162
    %479 = vmatprep.subr.mxu0 %v161
    %480 = vmatpush1.msra.mxu0 %v160
    %481 = vmatprep.subr.mxu0 %v159
    %482 = vmatpush1.msra.mxu0 %v158
    %483 = vmatprep.subr.mxu0 %v157
    %484 = vmatpush1.msra.mxu0 %v156
    %485 = vmatprep.subr.mxu0 %v155
    %486 = vmatpush1.msra.mxu0 %v154
    %487 = vmatprep.subr.mxu0 %v153
    %488 = vmatpush1.msra.mxu0 %v152
    %489 = vmatprep.subr.mxu0 %v151
    %490 = vmatpush1.msra.mxu0 %v150
    %491 = vmatprep.subr.mxu0 %v149
    %492 = vmatpush1.msra.mxu0 %v148
    %493 = vmatprep.subr.mxu0 %v211
    %494 = vmatpush2.msra.mxu0 %v210
    %495 = vmatprep.subr.mxu0 %v209
    %496 = vmatpush2.msra.mxu0 %v208
    %497 = vmatprep.subr.mxu0 %v207
    %498 = vmatpush2.msra.mxu0 %v206
    %499 = vmatprep.subr.mxu0 %v205
    %500 = vmatpush2.msra.mxu0 %v204
    %501 = vmatprep.subr.mxu0 %v203
    %502 = vmatpush2.msra.mxu0 %v202
    %503 = vmatprep.subr.mxu0 %v201
    %504 = vmatpush2.msra.mxu0 %v200
    %505 = vmatprep.subr.mxu0 %v199
    %506 = vmatpush2.msra.mxu0 %v198
    %507 = vmatprep.subr.mxu0 %v197
    %508 = vmatpush2.msra.mxu0 %v196
    %509 = vmatprep.subr.mxu0 %v195
    %510 = vmatpush2.msra.mxu0 %v194
    %511 = vmatprep.subr.mxu0 %v193
    %512 = vmatpush2.msra.mxu0 %v192
    %513 = vmatprep.subr.mxu0 %v191
    %514 = vmatpush2.msra.mxu0 %v190
    %515 = vmatprep.subr.mxu0 %v189
    %516 = vmatpush2.msra.mxu0 %v188
    %517 = vmatprep.subr.mxu0 %v187
    %518 = vmatpush2.msra.mxu0 %v186
    %519 = vmatprep.subr.mxu0 %v185
    %520 = vmatpush2.msra.mxu0 %v184
    %521 = vmatprep.subr.mxu0 %v183
    %522 = vmatpush2.msra.mxu0 %v182
    %523 = vmatprep.subr.mxu0 %v181
    %524 = vmatpush2.msra.mxu0 %v180
    %525 = vmatprep.mubr.f32.mxu0 %v303
    %526 = vmatmul.mubr.f32.gmra.mxu0 %v17
    %v527 = vpop.f32.mrf.mxu0
    %v528 = vadd.f32 %v457, %v527
    %v529 = vpop.f32.mrf.mxu0
    %v530 = vadd.f32 %v459, %v529
    %531 = vdwg.mxu0
    %532 = vmatprep.subr.mxu0 %v243
    %533 = vmatpush1.msra.mxu0 %v242
    %534 = vmatprep.subr.mxu0 %v241
    %535 = vmatpush1.msra.mxu0 %v240
    %536 = vmatprep.subr.mxu0 %v239
    %537 = vmatpush1.msra.mxu0 %v238
    %538 = vmatprep.subr.mxu0 %v237
    %539 = vmatpush1.msra.mxu0 %v236
    %540 = vmatprep.subr.mxu0 %v235
    %541 = vmatpush1.msra.mxu0 %v234
    %542 = vmatprep.subr.mxu0 %v233
    %543 = vmatpush1.msra.mxu0 %v232
    %544 = vmatprep.subr.mxu0 %v231
    %545 = vmatpush1.msra.mxu0 %v230
    %546 = vmatprep.subr.mxu0 %v229
    %547 = vmatpush1.msra.mxu0 %v228
    %548 = vmatprep.subr.mxu0 %v227
    %549 = vmatpush1.msra.mxu0 %v226
    %550 = vmatprep.subr.mxu0 %v225
    %551 = vmatpush1.msra.mxu0 %v224
    %552 = vmatprep.subr.mxu0 %v223
    %553 = vmatpush1.msra.mxu0 %v222
    %554 = vmatprep.subr.mxu0 %v221
    %555 = vmatpush1.msra.mxu0 %v220
    %556 = vmatprep.subr.mxu0 %v219
    %557 = vmatpush1.msra.mxu0 %v218
    %558 = vmatprep.subr.mxu0 %v217
    %559 = vmatpush1.msra.mxu0 %v216
    %560 = vmatprep.subr.mxu0 %v215
    %561 = vmatpush1.msra.mxu0 %v214
    %562 = vmatprep.subr.mxu0 %v213
    %563 = vmatpush1.msra.mxu0 %v212
    %564 = vmatprep.subr.mxu0 %v275
    %565 = vmatpush2.msra.mxu0 %v274
    %566 = vmatprep.subr.mxu0 %v273
    %567 = vmatpush2.msra.mxu0 %v272
    %568 = vmatprep.subr.mxu0 %v271
    %569 = vmatpush2.msra.mxu0 %v270
    %570 = vmatprep.subr.mxu0 %v269
    %571 = vmatpush2.msra.mxu0 %v268
    %572 = vmatprep.subr.mxu0 %v267
    %573 = vmatpush2.msra.mxu0 %v266
    %574 = vmatprep.subr.mxu0 %v265
    %575 = vmatpush2.msra.mxu0 %v264
    %576 = vmatprep.subr.mxu0 %v263
    %577 = vmatpush2.msra.mxu0 %v262
    %578 = vmatprep.subr.mxu0 %v261
    %579 = vmatpush2.msra.mxu0 %v260
    %580 = vmatprep.subr.mxu0 %v259
    %581 = vmatpush2.msra.mxu0 %v258
    %582 = vmatprep.subr.mxu0 %v257
    %583 = vmatpush2.msra.mxu0 %v256
    %584 = vmatprep.subr.mxu0 %v255
    %585 = vmatpush2.msra.mxu0 %v254
    %586 = vmatprep.subr.mxu0 %v253
    %587 = vmatpush2.msra.mxu0 %v252
    %588 = vmatprep.subr.mxu0 %v251
    %589 = vmatpush2.msra.mxu0 %v250
    %590 = vmatprep.subr.mxu0 %v249
    %591 = vmatpush2.msra.mxu0 %v248
    %592 = vmatprep.subr.mxu0 %v247
    %593 = vmatpush2.msra.mxu0 %v246
    %594 = vmatprep.subr.mxu0 %v245
    %595 = vmatpush2.msra.mxu0 %v244
    %596 = vmatprep.mubr.f32.mxu0 %v304
    %597 = vmatmul.mubr.f32.gmra.mxu0 %v18
    %v598 = vpop.f32.mrf.mxu0
    %v599 = vadd.f32 %v528, %v598
    %v600 = vpop.f32.mrf.mxu0
    %v601 = vadd.f32 %v530, %v600
    %602 = vdwg.mxu0
    %603 = vmatprep.subr.mxu0 0.0
    %604 = vmatpush1.msra.mxu0 0.0
    %605 = vmatprep.subr.mxu0 0.0
    %606 = vmatpush1.msra.mxu0 0.0
    %607 = vmatprep.subr.mxu0 0.0
    %608 = vmatpush1.msra.mxu0 0.0
    %609 = vmatprep.subr.mxu0 0.0
    %610 = vmatpush1.msra.mxu0 0.0
    %611 = vmatprep.subr.mxu0 0.0
    %612 = vmatpush1.msra.mxu0 0.0
    %613 = vmatprep.subr.mxu0 0.0
    %614 = vmatpush1.msra.mxu0 0.0
    %615 = vmatprep.subr.mxu0 0.0
    %616 = vmatpush1.msra.mxu0 0.0
    %617 = vmatprep.subr.mxu0 0.0
    %618 = vmatpush1.msra.mxu0 0.0
    %619 = vmatprep.subr.mxu0 0.0
    %620 = vmatpush1.msra.mxu0 0.0
    %621 = vmatprep.subr.mxu0 0.0
    %622 = vmatpush1.msra.mxu0 0.0
    %623 = vmatprep.subr.mxu0 0.0
    %624 = vmatpush1.msra.mxu0 0.0
    %625 = vmatprep.subr.mxu0 0.0
    %626 = vmatpush1.msra.mxu0 0.0
    %627 = vmatprep.subr.mxu0 %v317
    %628 = vmatpush1.msra.mxu0 %v314
    %629 = vmatprep.subr.mxu0 %v281
    %630 = vmatpush1.msra.mxu0 %v280
    %631 = vmatprep.subr.mxu0 %v279
    %632 = vmatpush1.msra.mxu0 %v278
    %633 = vmatprep.subr.mxu0 %v277
    %634 = vmatpush1.msra.mxu0 %v276
    %635 = vmatprep.subr.mxu0 0.0
    %636 = vmatpush2.msra.mxu0 0.0
    %637 = vmatprep.subr.mxu0 0.0
    %638 = vmatpush2.msra.mxu0 0.0
    %639 = vmatprep.subr.mxu0 0.0
    %640 = vmatpush2.msra.mxu0 0.0
    %641 = vmatprep.subr.mxu0 0.0
    %642 = vmatpush2.msra.mxu0 0.0
    %643 = vmatprep.subr.mxu0 0.0
    %644 = vmatpush2.msra.mxu0 0.0
    %645 = vmatprep.subr.mxu0 0.0
    %646 = vmatpush2.msra.mxu0 0.0
    %647 = vmatprep.subr.mxu0 0.0
    %648 = vmatpush2.msra.mxu0 0.0
    %649 = vmatprep.subr.mxu0 0.0
    %650 = vmatpush2.msra.mxu0 0.0
    %651 = vmatprep.subr.mxu0 0.0
    %652 = vmatpush2.msra.mxu0 0.0
    %653 = vmatprep.subr.mxu0 0.0
    %654 = vmatpush2.msra.mxu0 0.0
    %655 = vmatprep.subr.mxu0 0.0
    %656 = vmatpush2.msra.mxu0 0.0
    %657 = vmatprep.subr.mxu0 0.0
    %658 = vmatpush2.msra.mxu0 0.0
    %659 = vmatprep.subr.mxu0 0.0
    %660 = vmatpush2.msra.mxu0 0.0
    %661 = vmatprep.subr.mxu0 0.0
    %662 = vmatpush2.msra.mxu0 0.0
    %663 = vmatprep.subr.mxu0 0.0
    %664 = vmatpush2.msra.mxu0 0.0
    %665 = vmatprep.subr.mxu0 0.0
    %666 = vmatpush2.msra.mxu0 0.0
    %667 = vmatprep.mubr.f32.mxu0 0.0
    %668 = vmatmul.mubr.f32.gmra.mxu0 %v310
    %v669 = vpop.f32.mrf.mxu0
    %v670 = vadd.f32 %v599, %v669
    %v671 = vpop.f32.mrf.mxu0
    %v672 = vadd.f32 %v601, %v671
    %673 = vdwg.mxu0
    %v674 = vxor.u32 %v670, 2147483648
    %v675 = vxor.u32 %v672, 2147483648
    %v676 = vmul.f32 %v674, 1.442695
    %v677 = vpow.pop %v676
    %v678 = vmul.f32 %v675, 1.442695
    %v679 = vpow.pop %v678
    %v680 = vadd.f32 %v677, 1.0
    %v681 = vadd.f32 %v679, 1.0
    %v682 = vrcp.pop %v680
    %v683 = vmul.f32 1.0, %v682
    %v684 = vrcp.pop %v681
    %v685 = vmul.f32 1.0, %v684
    %v688 = vcombine.low %v683, %v685
    %vm690 = vcmask 1043456
    %vm691 = vcmask 326660
    %vm692 = vmor %vm691, %vm690
    %693 = vst.msk [vmem:[#allocation2] sm:$0xff] %vm692, %v688
    // Predicated region
    $region14: #{tpu_custom_call.1} parent=1 // pred_check
      _
    $region15: #{tpu_custom_call.1} parent=1 // pred_check_branch
      %695 = sbr.rel (0) target = $region17
    $region16: #{tpu_custom_call.1} parent=1 // pred_region
      %s697 = ssub.s32 128, 128
      %698 = vsyncadd [#allocation3], %s697
      %s700 = sshll.u32 [#allocation2], 4
      %s701 = int_to_ptr.vmem [resolvable:$true] %s700
      %703 = dma.vmem_to_hbm [thread:$0]  %s701, 128, %s3, [#allocation3]
    $region17: #{tpu_custom_call.1} parent=1 // pred_fallthru
      _
    // Predicated region
    $region18: #{tpu_custom_call.1} parent=1 // pred_check
      _
    $region19: #{tpu_custom_call.1} parent=1 // pred_check_branch
      %705 = sbr.rel (0) target = $region21
    $region20: #{tpu_custom_call.1} parent=1 // pred_region
      %706 = dma.done [#allocation3], 128
    $region21: #{tpu_custom_call.1} parent=1 // pred_fallthru
      _
    %707 = vsyncpa [#allocation3], 1

</llo_original>
